<compile_context>
chip_gen: v7x
topology: tpu7x:2x2x1
jax: 0.10.0
libtpu: 0.0.40
codegen_flags: <defaults>
</compile_context>

<pallas_src>
import functools

import jax
import jax.numpy as jnp
from jax.experimental import pallas as pl
from jax.experimental.pallas import tpu as pltpu

ALPHA = 2.0
BETA = 50.0
GAMMA = 1.0
EPS = 1e-06          # module eps (unused in forward, kept for parity)
NORM_EPS = 1e-12     # F.normalize default clamp


def _round_up(x, m):
    return (x + m - 1) // m * m


def _ms_loss_kernel(feat_tile_ref, feat_all_ref, t_col_ref, t_row_ref,
                    out_ref, *, b_real, mxu_dtype):
    i = pl.program_id(0)
    tm = feat_tile_ref.shape[0]
    bp = feat_all_ref.shape[0]

    f_t = feat_tile_ref[...].astype(jnp.float32)        # (TM, D)
    f_a = feat_all_ref[...].astype(jnp.float32)         # (Bp, D)

    # --- row L2-normalize via rsqrt (EUP) ---------------------------------
    inv_t = jax.lax.rsqrt(
        jnp.maximum(jnp.sum(f_t * f_t, axis=-1, keepdims=True),
                    NORM_EPS * NORM_EPS))
    inv_a = jax.lax.rsqrt(
        jnp.maximum(jnp.sum(f_a * f_a, axis=-1, keepdims=True),
                    NORM_EPS * NORM_EPS))
    fn_t = (f_t * inv_t).astype(mxu_dtype)
    fn_a = (f_a * inv_a).astype(mxu_dtype)

    # cosine similarity tile: (TM, Bp) on the MXU, f32 accumulation
    sim = jax.lax.dot_general(
        fn_t, fn_a, (((1,), (1,)), ((), ())),
        preferred_element_type=jnp.float32)

    # --- pairwise label masks (bool only, never materialized as f32) ------
    t_col = t_col_ref[...]                               # (TM, 1) int32
    t_row = t_row_ref[...]                               # (1, Bp) int32
    eq = t_col == t_row                                  # (TM, Bp)

    row_g = jax.lax.broadcasted_iota(jnp.int32, (tm, bp), 0) + i * tm
    col_g = jax.lax.broadcasted_iota(jnp.int32, (tm, bp), 1)
    col_ok = col_g < b_real                              # drop padded columns
    pos_mask = jnp.logical_and(jnp.logical_and(eq, row_g != col_g), col_ok)
    neg_mask = jnp.logical_and(jnp.logical_not(eq), col_ok)

    neg_inf = jnp.finfo(jnp.float32).min
    # Masks fused straight into the LSE inputs: on kept entries sim*mask == sim,
    # masked entries are overwritten with finfo.min (same as the torch path).
    xm_p = jnp.where(pos_mask, -ALPHA * (sim - GAMMA), neg_inf)
    xm_n = jnp.where(neg_mask, BETA * (sim - GAMMA), neg_inf)

    def lse_add_one(xm, mask):
        # logsumexp over [xm, 0] per row; rows with no kept entries -> 0
        m = jnp.maximum(jnp.max(xm, axis=-1, keepdims=True), 0.0)
        s = jnp.sum(jnp.exp(xm - m), axis=-1, keepdims=True) + jnp.exp(-m)
        out = m + jnp.log(s)
        has_any = jnp.any(mask, axis=-1, keepdims=True)
        return jnp.where(has_any, out, 0.0)

    per_row = (1.0 / ALPHA) * lse_add_one(xm_p, pos_mask) \
            + (1.0 / BETA) * lse_add_one(xm_n, neg_mask)          # (TM, 1)

    # zero out padded rows so the wrapper can just sum / B
    row_ok = (jax.lax.broadcasted_iota(jnp.int32, (tm, 1), 0) + i * tm) < b_real
    out_ref[...] = jnp.where(row_ok, per_row, 0.0)


def multi_similarity_loss(feature: jax.Array, targets: jax.Array,
                          *, tm: int = 128) -> jax.Array:
    """feature: (B, D) float32/bf16, targets: (B,) int32 -> scalar float32."""
    B, D = feature.shape
    TM = min(tm, _round_up(B, 8))            # row-tile (multiple of 8 sublanes)
    Bp = _round_up(B, TM)

    if Bp != B:                              # pad rows; padded rows/cols are
        feature = jnp.pad(feature, ((0, Bp - B), (0, 0)))   # masked in-kernel
        targets = jnp.pad(targets, (0, Bp - B), constant_values=-1)

    t_col = targets.reshape(Bp, 1).astype(jnp.int32)
    t_row = targets.reshape(1, Bp).astype(jnp.int32)

    # keep native dtype on the DMA path; only go bf16 on the MXU if the input
    # is already bf16 (v5e has no bf16 VPU/EUP path, so elementwise stays f32)
    mxu_dtype = jnp.bfloat16 if feature.dtype == jnp.bfloat16 else jnp.float32
    kernel = functools.partial(_ms_loss_kernel, b_real=B, mxu_dtype=mxu_dtype)

    grid = (Bp // TM,)
    per_row = pl.pallas_call(
        kernel,
        out_shape=jax.ShapeDtypeStruct((Bp, 1), jnp.float32),
        grid_spec=pltpu.PrefetchScalarGridSpec(
            num_scalar_prefetch=0,
            grid=grid,
            in_specs=[
                pl.BlockSpec((TM, D), lambda i: (i, 0)),   # row tile of features
                pl.BlockSpec((Bp, D), lambda i: (0, 0)),   # full features (stays resident)
                pl.BlockSpec((TM, 1), lambda i: (i, 0)),   # labels of tile rows
                pl.BlockSpec((1, Bp), lambda i: (0, 0)),   # all labels
            ],
            out_specs=pl.BlockSpec((TM, 1), lambda i: (i, 0)),
        ),
        compiler_params=pltpu.CompilerParams(
            dimension_semantics=("parallel",),        # megacore-shard rows (v7x)
            vmem_limit_bytes=32 * 1024 * 1024,
        ),
    )(feature, feature, t_col, t_row)

    return jnp.sum(per_row) / B


def _reference(feature, targets):
    # pure-JAX reference mirroring the PyTorch module
    B = feature.shape[0]
    feature = feature.astype(jnp.float32)
    norm = jnp.sqrt(jnp.sum(feature * feature, axis=-1, keepdims=True))
    fn = feature / jnp.maximum(norm, NORM_EPS)
    sim = fn @ fn.T
    eq = targets[:, None] == targets[None, :]
    is_pos = eq.astype(jnp.float32) - jnp.eye(B, dtype=jnp.float32)
    is_neg = (~eq).astype(jnp.float32)
    logit_p = -ALPHA * (sim * is_pos - GAMMA)
    logit_n = BETA * (sim * is_neg - GAMMA)

    def lse(x, mask):
        xm = jnp.where(mask, x, jnp.finfo(jnp.float32).min)
        xm = jnp.concatenate([xm, jnp.zeros((B, 1), jnp.float32)], axis=1)
        out = jax.scipy.special.logsumexp(xm, axis=1, keepdims=True)
        return jnp.where(jnp.any(mask, axis=1, keepdims=True), out, 0.0)

    return jnp.mean((1.0 / ALPHA) * lse(logit_p, is_pos > 0.5)
                    + (1.0 / BETA) * lse(logit_n, is_neg > 0.5))


if __name__ == "__main__":
    key = jax.random.PRNGKey(0)
    kf, kt = jax.random.split(key)

    # small shapes consistent with the module
    B, D = 8, 32
    feature = jax.random.normal(kf, (B, D), dtype=jnp.float32)
    targets = jax.random.randint(kt, (B,), 0, 4, dtype=jnp.int32)

    loss = multi_similarity_loss(feature, targets)
    jax.block_until_ready(loss)
    ref = _reference(feature, targets)
    assert jnp.allclose(loss, ref, atol=1e-5, rtol=1e-5), (loss, ref)

    # exercise the row-padding path (B not a multiple of 8)
    B2 = 6
    feature2 = feature[:B2]
    targets2 = targets[:B2]
    loss2 = multi_similarity_loss(feature2, targets2)
    jax.block_until_ready(loss2)
    ref2 = _reference(feature2, targets2)
    assert jnp.allclose(loss2, ref2, atol=1e-5, rtol=1e-5), (loss2, ref2)

    print("KERNEL_OK")
</pallas_src>

<mosaic_0001>
module attributes {stable_mosaic.version = 11 : i64} {
  func.func @_ms_loss_kernel(%arg0: i32, %arg1: memref<8x32xf32, #tpu.memory_space<vmem>>, %arg2: memref<8x32xf32, #tpu.memory_space<vmem>>, %arg3: memref<8x1xi32, #tpu.memory_space<vmem>>, %arg4: memref<1x8xi32, #tpu.memory_space<vmem>>, %arg5: memref<8x1xf32, #tpu.memory_space<vmem>>) attributes {dimension_semantics = [#tpu.dimension_semantics<parallel>], iteration_bounds = array<i64: 1>, scalar_prefetch = 0 : i64, scratch_operands = 0 : i64, tpu.core_type = #tpu.core_type<tc>, window_params = [{transform_indices = @transform_0, window_bounds = array<i64: 8, 32>}, {pipeline_mode = #tpu.pipeline_mode<synchronous>, transform_indices = @transform_1, window_bounds = array<i64: 8, 32>}, {transform_indices = @transform_2, window_bounds = array<i64: 8, 1>}, {pipeline_mode = #tpu.pipeline_mode<synchronous>, transform_indices = @transform_3, window_bounds = array<i64: 1, 8>}, {transform_indices = @transform_4, window_bounds = array<i64: 8, 1>}]} {
    %c0 = arith.constant 0 : index
    %c0_0 = arith.constant 0 : index
    %0 = vector.load %arg1[%c0, %c0_0] : memref<8x32xf32, #tpu.memory_space<vmem>>, vector<8x32xf32>
    %c0_1 = arith.constant 0 : index
    %c0_2 = arith.constant 0 : index
    %1 = vector.load %arg2[%c0_1, %c0_2] : memref<8x32xf32, #tpu.memory_space<vmem>>, vector<8x32xf32>
    %2 = arith.mulf %0, %0 : vector<8x32xf32>
    %cst = arith.constant dense<0.000000e+00> : vector<8xf32>
    %3 = vector.multi_reduction <add>, %2, %cst [1] : vector<8x32xf32> to vector<8xf32>
    %4 = vector.shape_cast %3 : vector<8xf32> to vector<8x1xf32>
    %cst_3 = arith.constant 1.000000e-24 : f32
    %5 = vector.broadcast %cst_3 : f32 to vector<8x1xf32>
    %6 = arith.maximumf %4, %5 : vector<8x1xf32>
    %7 = math.rsqrt %6 : vector<8x1xf32>
    %8 = arith.mulf %1, %1 : vector<8x32xf32>
    %cst_4 = arith.constant dense<0.000000e+00> : vector<8xf32>
    %9 = vector.multi_reduction <add>, %8, %cst_4 [1] : vector<8x32xf32> to vector<8xf32>
    %10 = vector.shape_cast %9 : vector<8xf32> to vector<8x1xf32>
    %cst_5 = arith.constant 1.000000e-24 : f32
    %11 = vector.broadcast %cst_5 : f32 to vector<8x1xf32>
    %12 = arith.maximumf %10, %11 : vector<8x1xf32>
    %13 = math.rsqrt %12 : vector<8x1xf32>
    %14 = vector.broadcast %7 : vector<8x1xf32> to vector<8x32xf32>
    %15 = arith.mulf %0, %14 : vector<8x32xf32>
    %16 = vector.broadcast %13 : vector<8x1xf32> to vector<8x32xf32>
    %17 = arith.mulf %1, %16 : vector<8x32xf32>
    %cst_6 = arith.constant dense<0.000000e+00> : vector<8x8xf32>
    %18 = tpu.matmul %15, %17, %cst_6 {dimension_numbers = #tpu.dot_dimension_numbers<[1], [1], [0], [0], [0, 0, 1, 0], [], []>} : vector<8x32xf32>, vector<8x32xf32>, vector<8x8xf32> -> vector<8x8xf32>
    %c0_7 = arith.constant 0 : index
    %c0_8 = arith.constant 0 : index
    %19 = vector.load %arg3[%c0_7, %c0_8] : memref<8x1xi32, #tpu.memory_space<vmem>>, vector<8x1xi32>
    %c0_9 = arith.constant 0 : index
    %c0_10 = arith.constant 0 : index
    %20 = vector.load %arg4[%c0_9, %c0_10] : memref<1x8xi32, #tpu.memory_space<vmem>>, vector<1x8xi32>
    %21 = vector.broadcast %19 : vector<8x1xi32> to vector<8x8xi32>
    %22 = vector.broadcast %20 : vector<1x8xi32> to vector<8x8xi32>
    %23 = arith.cmpi eq, %21, %22 : vector<8x8xi32>
    %24 = tpu.iota {dimensions = array<i32: 0>} : vector<8x8xi32>
    %c8_i32 = arith.constant 8 : i32
    %25 = arith.muli %arg0, %c8_i32 : i32
    %26 = vector.broadcast %25 : i32 to vector<8x8xi32>
    %27 = arith.addi %24, %26 : vector<8x8xi32>
    %28 = tpu.iota {dimensions = array<i32: 1>} : vector<8x8xi32>
    %c8_i32_11 = arith.constant 8 : i32
    %29 = vector.broadcast %c8_i32_11 : i32 to vector<8x8xi32>
    %30 = arith.cmpi slt, %28, %29 : vector<8x8xi32>
    %31 = arith.cmpi ne, %27, %28 : vector<8x8xi32>
    %32 = arith.andi %23, %31 : vector<8x8xi1>
    %33 = arith.andi %32, %30 : vector<8x8xi1>
    %cst_12 = arith.constant dense<true> : vector<8x8xi1>
    %34 = arith.xori %23, %cst_12 : vector<8x8xi1>
    %35 = arith.andi %34, %30 : vector<8x8xi1>
    %cst_13 = arith.constant 1.000000e+00 : f32
    %36 = vector.broadcast %cst_13 : f32 to vector<8x8xf32>
    %37 = arith.subf %18, %36 : vector<8x8xf32>
    %cst_14 = arith.constant -2.000000e+00 : f32
    %38 = vector.broadcast %cst_14 : f32 to vector<8x8xf32>
    %39 = arith.mulf %38, %37 : vector<8x8xf32>
    %cst_15 = arith.constant -3.40282347E+38 : f32
    %40 = vector.broadcast %cst_15 : f32 to vector<8x8xf32>
    %41 = arith.select %33, %39, %40 : vector<8x8xi1>, vector<8x8xf32>
    %cst_16 = arith.constant 1.000000e+00 : f32
    %42 = vector.broadcast %cst_16 : f32 to vector<8x8xf32>
    %43 = arith.subf %18, %42 : vector<8x8xf32>
    %cst_17 = arith.constant 5.000000e+01 : f32
    %44 = vector.broadcast %cst_17 : f32 to vector<8x8xf32>
    %45 = arith.mulf %44, %43 : vector<8x8xf32>
    %cst_18 = arith.constant -3.40282347E+38 : f32
    %46 = vector.broadcast %cst_18 : f32 to vector<8x8xf32>
    %47 = arith.select %35, %45, %46 : vector<8x8xi1>, vector<8x8xf32>
    %cst_19 = arith.constant dense<0xFF800000> : vector<8xf32>
    %48 = vector.multi_reduction <maximumf>, %41, %cst_19 [1] : vector<8x8xf32> to vector<8xf32>
    %49 = vector.shape_cast %48 : vector<8xf32> to vector<8x1xf32>
    %cst_20 = arith.constant 0.000000e+00 : f32
    %50 = vector.broadcast %cst_20 : f32 to vector<8x1xf32>
    %51 = arith.maximumf %49, %50 : vector<8x1xf32>
    %52 = vector.broadcast %51 : vector<8x1xf32> to vector<8x8xf32>
    %53 = arith.subf %41, %52 : vector<8x8xf32>
    %54 = math.exp %53 : vector<8x8xf32>
    %cst_21 = arith.constant dense<0.000000e+00> : vector<8xf32>
    %55 = vector.multi_reduction <add>, %54, %cst_21 [1] : vector<8x8xf32> to vector<8xf32>
    %56 = vector.shape_cast %55 : vector<8xf32> to vector<8x1xf32>
    %cst_22 = arith.constant 0.000000e+00 : f32
    %57 = vector.broadcast %cst_22 : f32 to vector<8x1xf32>
    %58 = arith.subf %57, %51 : vector<8x1xf32>
    %59 = math.exp %58 : vector<8x1xf32>
    %60 = arith.addf %56, %59 : vector<8x1xf32>
    %61 = math.log %60 : vector<8x1xf32>
    %62 = arith.addf %51, %61 : vector<8x1xf32>
    %cst_23 = arith.constant 1.000000e+00 : f32
    %cst_24 = arith.constant 0.000000e+00 : f32
    %63 = vector.broadcast %cst_23 : f32 to vector<8x8xf32>
    %64 = vector.broadcast %cst_24 : f32 to vector<8x8xf32>
    %65 = arith.select %33, %63, %64 : vector<8x8xi1>, vector<8x8xf32>
    %cst_25 = arith.constant dense<0xFF800000> : vector<8xf32>
    %66 = vector.multi_reduction <maximumf>, %65, %cst_25 [1] : vector<8x8xf32> to vector<8xf32>
    %cst_26 = arith.constant 0.000000e+00 : f32
    %67 = vector.broadcast %cst_26 : f32 to vector<8xf32>
    %68 = arith.cmpf ogt, %66, %67 : vector<8xf32>
    %69 = vector.shape_cast %68 : vector<8xi1> to vector<8x1xi1>
    %cst_27 = arith.constant 0.000000e+00 : f32
    %70 = vector.broadcast %cst_27 : f32 to vector<8x1xf32>
    %71 = arith.select %69, %62, %70 : vector<8x1xi1>, vector<8x1xf32>
    %cst_28 = arith.constant 5.000000e-01 : f32
    %72 = vector.broadcast %cst_28 : f32 to vector<8x1xf32>
    %73 = arith.mulf %72, %71 : vector<8x1xf32>
    %cst_29 = arith.constant dense<0xFF800000> : vector<8xf32>
    %74 = vector.multi_reduction <maximumf>, %47, %cst_29 [1] : vector<8x8xf32> to vector<8xf32>
    %75 = vector.shape_cast %74 : vector<8xf32> to vector<8x1xf32>
    %cst_30 = arith.constant 0.000000e+00 : f32
    %76 = vector.broadcast %cst_30 : f32 to vector<8x1xf32>
    %77 = arith.maximumf %75, %76 : vector<8x1xf32>
    %78 = vector.broadcast %77 : vector<8x1xf32> to vector<8x8xf32>
    %79 = arith.subf %47, %78 : vector<8x8xf32>
    %80 = math.exp %79 : vector<8x8xf32>
    %cst_31 = arith.constant dense<0.000000e+00> : vector<8xf32>
    %81 = vector.multi_reduction <add>, %80, %cst_31 [1] : vector<8x8xf32> to vector<8xf32>
    %82 = vector.shape_cast %81 : vector<8xf32> to vector<8x1xf32>
    %cst_32 = arith.constant 0.000000e+00 : f32
    %83 = vector.broadcast %cst_32 : f32 to vector<8x1xf32>
    %84 = arith.subf %83, %77 : vector<8x1xf32>
    %85 = math.exp %84 : vector<8x1xf32>
    %86 = arith.addf %82, %85 : vector<8x1xf32>
    %87 = math.log %86 : vector<8x1xf32>
    %88 = arith.addf %77, %87 : vector<8x1xf32>
    %cst_33 = arith.constant 1.000000e+00 : f32
    %cst_34 = arith.constant 0.000000e+00 : f32
    %89 = vector.broadcast %cst_33 : f32 to vector<8x8xf32>
    %90 = vector.broadcast %cst_34 : f32 to vector<8x8xf32>
    %91 = arith.select %35, %89, %90 : vector<8x8xi1>, vector<8x8xf32>
    %cst_35 = arith.constant dense<0xFF800000> : vector<8xf32>
    %92 = vector.multi_reduction <maximumf>, %91, %cst_35 [1] : vector<8x8xf32> to vector<8xf32>
    %cst_36 = arith.constant 0.000000e+00 : f32
    %93 = vector.broadcast %cst_36 : f32 to vector<8xf32>
    %94 = arith.cmpf ogt, %92, %93 : vector<8xf32>
    %95 = vector.shape_cast %94 : vector<8xi1> to vector<8x1xi1>
    %cst_37 = arith.constant 0.000000e+00 : f32
    %96 = vector.broadcast %cst_37 : f32 to vector<8x1xf32>
    %97 = arith.select %95, %88, %96 : vector<8x1xi1>, vector<8x1xf32>
    %cst_38 = arith.constant 2.000000e-02 : f32
    %98 = vector.broadcast %cst_38 : f32 to vector<8x1xf32>
    %99 = arith.mulf %98, %97 : vector<8x1xf32>
    %100 = arith.addf %73, %99 : vector<8x1xf32>
    %101 = tpu.iota {dimensions = array<i32: 0>} : vector<8x1xi32>
    %c8_i32_39 = arith.constant 8 : i32
    %102 = arith.muli %arg0, %c8_i32_39 : i32
    %103 = vector.broadcast %102 : i32 to vector<8x1xi32>
    %104 = arith.addi %101, %103 : vector<8x1xi32>
    %c8_i32_40 = arith.constant 8 : i32
    %105 = vector.broadcast %c8_i32_40 : i32 to vector<8x1xi32>
    %106 = arith.cmpi slt, %104, %105 : vector<8x1xi32>
    %cst_41 = arith.constant 0.000000e+00 : f32
    %107 = vector.broadcast %cst_41 : f32 to vector<8x1xf32>
    %108 = arith.select %106, %100, %107 : vector<8x1xi1>, vector<8x1xf32>
    %c0_42 = arith.constant 0 : index
    %c0_43 = arith.constant 0 : index
    %109 = vector.load %arg5[%c0_42, %c0_43] : memref<8x1xf32, #tpu.memory_space<vmem>>, vector<8x1xf32>
    tpu.vector_store %arg5[%c0_42, %c0_43], %108 {strides = array<i32>} : memref<8x1xf32, #tpu.memory_space<vmem>>, vector<8x1xf32>,
    return
  }
  func.func @transform_0(%arg0: i32) -> (i32, i32) {
    %c0_i32 = arith.constant 0 : i32
    %c0_i32_0 = arith.constant 0 : i32
    return %arg0, %c0_i32 : i32, i32
  }
  func.func @transform_1(%arg0: i32) -> (i32, i32) {
    %c0_i32 = arith.constant 0 : i32
    %c0_i32_0 = arith.constant 0 : i32
    %c0_i32_1 = arith.constant 0 : i32
    return %c0_i32, %c0_i32_0 : i32, i32
  }
  func.func @transform_2(%arg0: i32) -> (i32, i32) {
    %c0_i32 = arith.constant 0 : i32
    %c0_i32_0 = arith.constant 0 : i32
    return %arg0, %c0_i32 : i32, i32
  }
  func.func @transform_3(%arg0: i32) -> (i32, i32) {
    %c0_i32 = arith.constant 0 : i32
    %c0_i32_0 = arith.constant 0 : i32
    %c0_i32_1 = arith.constant 0 : i32
    return %c0_i32, %c0_i32_0 : i32, i32
  }
  func.func @transform_4(%arg0: i32) -> (i32, i32) {
    %c0_i32 = arith.constant 0 : i32
    %c0_i32_0 = arith.constant 0 : i32
    return %arg0, %c0_i32 : i32, i32
  }
}

</mosaic_0001>

<llo_original>
// kernel: tpu_custom_call.1
$region0: #{tpu_custom_call.1}
  #allocation0 [shape = 'u32[]', space=smem, size = 0x4, offset = 0x4, fixed_abs, tag = 'smem constant byte address 0x4 - core index']
  #allocation1 [shape = 'u32[144,128]{1,0:T(1,128)}', space=vmem, size = 0x12000, scoped, tag = 'internal scratch']
  %s0 = inlined_call_operand.vmem [shape: f32[8,32], index: 0, kind: input, shape index: {}]
  %s1 = inlined_call_operand.hbm [shape: f32[8,32], index: 1, kind: input, shape index: {}]
  %s2 = inlined_call_operand.vmem [shape: s32[8,1], index: 2, kind: input, shape index: {}]
  %s3 = inlined_call_operand.vmem [shape: s32[1,8], index: 3, kind: input, shape index: {}]
  %s4 = inlined_call_operand.vmem [shape: f32[8,1], index: 4, kind: output, shape index: {}]
  %s5 = sld [smem:[#allocation0]]
  $region30: #{tpu_custom_call.1} parent=0
    _
  %s7 = ssub.s32 1, %s5
  %s8 = scalar_select 0, %s7, %s5
  $region1: #{tpu_custom_call.1} parent=0
    #allocation2 [shape = 'u8[4096]{0}', space=vmem, size = 0x1000, scoped, tag = 'input window, operand 1, single buffered']
    #allocation3 [shape = 's32[1]{0}', space=sflag, size = 0x4, scoped, tag = 'scoped memory for tpu_custom_call.1']
    %9 = vsyncpa [#allocation3], 0
    // Predicated region
    $region2: #{tpu_custom_call.1} parent=1 // pred_check
      _
    $region3: #{tpu_custom_call.1} parent=1 // pred_check_branch
      %11 = sbr.rel (0) target = $region5
    $region4: #{tpu_custom_call.1} parent=1 // pred_region
      _
    $region5: #{tpu_custom_call.1} parent=1 // pred_fallthru
      _
    // Predicated region
    $region6: #{tpu_custom_call.1} parent=1 // pred_check
      _
    $region7: #{tpu_custom_call.1} parent=1 // pred_check_branch
      %13 = sbr.rel (0) target = $region9
    $region8: #{tpu_custom_call.1} parent=1 // pred_region
      %s15 = ssub.s32 128, 128
      %16 = vsyncadd [#allocation3], %s15
      %s18 = sshll.u32 [#allocation2], 4
      %s19 = int_to_ptr.vmem [resolvable:$true] %s18
      %21 = dma.hbm_to_vmem [thread:$0]  %s1, 128, %s19, [#allocation3]
    $region9: #{tpu_custom_call.1} parent=1 // pred_fallthru
      _
    // Predicated region
    $region10: #{tpu_custom_call.1} parent=1 // pred_check
      _
    $region11: #{tpu_custom_call.1} parent=1 // pred_check_branch
      %23 = sbr.rel (0) target = $region13
    $region12: #{tpu_custom_call.1} parent=1 // pred_region
      _
    $region13: #{tpu_custom_call.1} parent=1 // pred_fallthru
      _
    // Predicated region
    $region14: #{tpu_custom_call.1} parent=1 // pred_check
      _
    $region15: #{tpu_custom_call.1} parent=1 // pred_check_branch
      %25 = sbr.rel (0) target = $region17
    $region16: #{tpu_custom_call.1} parent=1 // pred_region
      _
    $region17: #{tpu_custom_call.1} parent=1 // pred_fallthru
      _
    // Predicated region
    $region18: #{tpu_custom_call.1} parent=1 // pred_check
      _
    $region19: #{tpu_custom_call.1} parent=1 // pred_check_branch
      %27 = sbr.rel (0) target = $region21
    $region20: #{tpu_custom_call.1} parent=1 // pred_region
      %28 = dma.done [#allocation3], 128
    $region21: #{tpu_custom_call.1} parent=1 // pred_fallthru
      _
    %v29 = vld [vmem:[%s0] sm:$0xff]
    %v30 = vld [vmem:[#allocation2] sm:$0xff]
    %v31 = vmul.f32 %v29, %v29
    %vm32 = vcmask 261120
    %v33 = vsel %vm32, %v31, 0.0
    %34 = vadd.xlane.f32.xlu0 %v33
    %v35 = vpop.xlane.xlu0 %34
    %v36 = vmax.f32 %v35, 1e-24
    %v37 = vrsqrt.pop %v36
    %v38 = vmul.f32 %v30, %v30
    %v39 = vsel %vm32, %v38, 0.0
    %40 = vadd.xlane.f32.xlu0 %v39
    %v41 = vpop.xlane.xlu0 %40
    %v42 = vmax.f32 %v41, 1e-24
    %v43 = vrsqrt.pop %v42
    %v44 = vmul.f32 %v29, %v37
    %v45 = vmul.f32 %v30, %v43
    %v47 = vsel %vm32, %v44, 0
    %v50 = vsel %vm32, %v45, 0
    %52 = vmatprep.subr.mxu0 0.0
    %53 = vmatpush1.xpose.msra.mxu0 %v50
    %54 = vmatprep.subr.mxu0 0.0
    %55 = vmatpush1.xpose.msra.mxu0 0.0
    %56 = vmatprep.subr.mxu0 0.0
    %57 = vmatpush1.xpose.msra.mxu0 0.0
    %58 = vmatprep.subr.mxu0 0.0
    %59 = vmatpush1.xpose.msra.mxu0 0.0
    %60 = vmatprep.subr.mxu0 0.0
    %61 = vmatpush1.xpose.msra.mxu0 0.0
    %62 = vmatprep.subr.mxu0 0.0
    %63 = vmatpush1.xpose.msra.mxu0 0.0
    %64 = vmatprep.subr.mxu0 0.0
    %65 = vmatpush1.xpose.msra.mxu0 0.0
    %66 = vmatprep.subr.mxu0 0.0
    %67 = vmatpush1.xpose.msra.mxu0 0.0
    %68 = vmatprep.subr.mxu0 0.0
    %69 = vmatpush1.xpose.msra.mxu0 0.0
    %70 = vmatprep.subr.mxu0 0.0
    %71 = vmatpush1.xpose.msra.mxu0 0.0
    %72 = vmatprep.subr.mxu0 0.0
    %73 = vmatpush1.xpose.msra.mxu0 0.0
    %74 = vmatprep.subr.mxu0 0.0
    %75 = vmatpush1.xpose.msra.mxu0 0.0
    %76 = vmatprep.subr.mxu0 0.0
    %77 = vmatpush1.xpose.msra.mxu0 0.0
    %78 = vmatprep.subr.mxu0 0.0
    %79 = vmatpush1.xpose.msra.mxu0 0.0
    %80 = vmatprep.subr.mxu0 0.0
    %81 = vmatpush1.xpose.msra.mxu0 0.0
    %82 = vmatprep.subr.mxu0 0.0
    %83 = vmatpush1.xpose.msra.mxu0 0.0
    %84 = vmatprep.subr.mxu0 0.0
    %85 = vmatpush1.xpose.msra.mxu0 0.0
    %86 = vmatprep.subr.mxu0 0.0
    %87 = vmatpush1.xpose.msra.mxu0 0.0
    %88 = vmatprep.subr.mxu0 0.0
    %89 = vmatpush1.xpose.msra.mxu0 0.0
    %90 = vmatprep.subr.mxu0 0.0
    %91 = vmatpush1.xpose.msra.mxu0 0.0
    %92 = vmatprep.subr.mxu0 0.0
    %93 = vmatpush1.xpose.msra.mxu0 0.0
    %94 = vmatprep.subr.mxu0 0.0
    %95 = vmatpush1.xpose.msra.mxu0 0.0
    %96 = vmatprep.subr.mxu0 0.0
    %97 = vmatpush1.xpose.msra.mxu0 0.0
    %98 = vmatprep.subr.mxu0 0.0
    %99 = vmatpush1.xpose.msra.mxu0 0.0
    %100 = vmatprep.subr.mxu0 0.0
    %101 = vmatpush1.xpose.msra.mxu0 0.0
    %102 = vmatprep.subr.mxu0 0.0
    %103 = vmatpush1.xpose.msra.mxu0 0.0
    %104 = vmatprep.subr.mxu0 0.0
    %105 = vmatpush1.xpose.msra.mxu0 0.0
    %106 = vmatprep.subr.mxu0 0.0
    %107 = vmatpush1.xpose.msra.mxu0 0.0
    %108 = vmatprep.subr.mxu0 0.0
    %109 = vmatpush1.xpose.msra.mxu0 0.0
    %110 = vmatprep.subr.mxu0 0.0
    %111 = vmatpush1.xpose.msra.mxu0 0.0
    %112 = vmatprep.subr.mxu0 0.0
    %113 = vmatpush1.xpose.msra.mxu0 0.0
    %114 = vmatprep.subr.mxu0 0.0
    %115 = vmatpush1.xpose.msra.mxu0 0.0
    %116 = vmatprep.mubr.f32.mxu0 0.0
    %117 = vmatmul.mubr.f32.gmra.mrb[0].mxu0 %v47
    %v118 = vpop.f32.mrb[0].mxu0
    %v119 = vadd.f32 0.0, %v118
    %v120 = vpop.f32.mrb[0].mxu0
    %121 = vdwg.mxu0
    %v122 = vld [vmem:[%s2] sm:$0xff]
    %v123 = vld [vmem:[%s3] sm:$0x1]
    %124 = vset.pattern.permute.xlu0 0
    %125 = vperm.xlu0 %124, %v122
    %v126 = vpop.permute.xlu0 %125
    %v127 = vlaneseq
    %v128 = vshrl.u32 %v127, 7
    %v129 = vsub.s32 0, %v128
    %v130 = vrot.slane %v123, %v129
    %vm131 = vcmp.eq.s32.totalorder %v126, %v130
    %v132 = vlaneseq
    %v133 = vshrl.u32 %v132, 7
    %s134 = smul.u32 0, 8
    %v135 = vstv %s134
    %v136 = vadd.s32 %v133, %v135
    %v137 = vlaneseq
    %v138 = vand.u32 %v137, 127
    %vm139 = vcmp.lt.s32.totalorder %v138, 8
    %vm140 = vcmp.ne.s32.totalorder %v136, %v138
    %vm141 = vmand %vm131, %vm140
    %vm142 = vmand %vm141, %vm139
    %vm143 = vmxor %vm131, 1
    %vm144 = vmand %vm143, %vm139
    %v145 = vsub.f32 %v119, 1.0
    %v146 = vmul.f32 %v145, -2.0
    %v147 = vsel %vm142, %v146, -3.4028235e+38
    %v148 = vmul.f32 %v145, 50.0
    %v149 = vsel %vm144, %v148, -3.4028235e+38
    %vm150 = vcmask 64512
    %v151 = vsel %vm150, %v147, -inf
    %152 = vmax.xlane.f32.xlu0 %v151
    %v153 = vpop.xlane.xlu0 %152
    %v154 = vmax.f32 %v153, 0.0
    %v155 = vsub.f32 %v147, %v154
    %v156 = vmul.f32 %v155, 1.442695
    %v157 = vpow.pop %v156
    %v158 = vsel %vm150, %v157, 0.0
    %159 = vadd.xlane.f32.xlu0 %v158
    %v160 = vpop.xlane.xlu0 %159
    %v161 = vsub.f32 0.0, %v154
    %v162 = vmul.f32 %v161, 1.442695
    %v163 = vpow.pop %v162
    %v164 = vadd.f32 %v160, %v163
    %v165 = vlog2.pop %v164
    %v166 = vmul.f32 %v165, 0.6931472
    %v167 = vadd.f32 %v154, %v166
    %v168 = vsel %vm142, 1.0, 0.0
    %v169 = vsel %vm150, %v168, -inf
    %170 = vmax.xlane.f32.xlu0 %v169
    %v171 = vpop.xlane.xlu0 %170
    %vm172 = vcmp.gt.f32.partialorder %v171, 0.0
    %v173 = vsel %vm172, %v167, 0.0
    %v174 = vmul.f32 %v173, 0.5
    %v175 = vsel %vm150, %v149, -inf
    %176 = vmax.xlane.f32.xlu0 %v175
    %v177 = vpop.xlane.xlu0 %176
    %v178 = vmax.f32 %v177, 0.0
    %v179 = vsub.f32 %v149, %v178
    %v180 = vmul.f32 %v179, 1.442695
    %v181 = vpow.pop %v180
    %v182 = vsel %vm150, %v181, 0.0
    %183 = vadd.xlane.f32.xlu0 %v182
    %v184 = vpop.xlane.xlu0 %183
    %v185 = vsub.f32 0.0, %v178
    %v186 = vmul.f32 %v185, 1.442695
    %v187 = vpow.pop %v186
    %v188 = vadd.f32 %v184, %v187
    %v189 = vlog2.pop %v188
    %v190 = vmul.f32 %v189, 0.6931472
    %v191 = vadd.f32 %v178, %v190
    %v192 = vsel %vm144, 1.0, 0.0
    %v193 = vsel %vm150, %v192, -inf
    %194 = vmax.xlane.f32.xlu0 %v193
    %v195 = vpop.xlane.xlu0 %194
    %vm196 = vcmp.gt.f32.partialorder %v195, 0.0
    %v197 = vsel %vm196, %v191, 0.0
    %v198 = vmul.f32 %v197, 0.02
    %v199 = vadd.f32 %v174, %v198
    %vm200 = vcmp.lt.s32.totalorder %v136, 8
    %v201 = vsel %vm200, %v199, 0.0
    %vm202 = vcmask 7168
    %203 = vst.msk [vmem:[%s4] sm:$0xff] %vm202, %v201
    // Predicated region
    $region22: #{tpu_custom_call.1} parent=1 // pred_check
      _
    $region23: #{tpu_custom_call.1} parent=1 // pred_check_branch
      %205 = sbr.rel (0) target = $region25
    $region24: #{tpu_custom_call.1} parent=1 // pred_region
      _
    $region25: #{tpu_custom_call.1} parent=1 // pred_fallthru
      _
    // Predicated region
    $region26: #{tpu_custom_call.1} parent=1 // pred_check
      _
    $region27: #{tpu_custom_call.1} parent=1 // pred_check_branch
      %207 = sbr.rel (0) target = $region29
    $region28: #{tpu_custom_call.1} parent=1 // pred_region
      _
    $region29: #{tpu_custom_call.1} parent=1 // pred_fallthru
      _
    %208 = vsyncpa [#allocation3], 1

</llo_original>
